<compile_context>
chip_gen: v7x
topology: tpu7x:2x2x1
jax: 0.10.0
libtpu: 0.0.40
codegen_flags: <defaults>
</compile_context>

<pallas_src>
import functools

import jax
import jax.numpy as jnp
from jax.experimental import pallas as pl
from jax.experimental.pallas import tpu as pltpu

BN_EPS = 1e-5


# --------------------------------------------------------------------------
# Per-generation VMEM budgets and spatial tile selection
# --------------------------------------------------------------------------
def _budgets():
    """Return (vmem_limit_bytes, tile_budget_bytes) for this TPU generation."""
    vmem_bytes = 64 * 1024 * 1024
    try:
        vmem_bytes = int(pltpu.get_tpu_info().vmem_capacity_bytes)
    except Exception:
        pass  # conservative fallback (treat as v7x-sized VMEM)
    if vmem_bytes >= 96 * 1024 * 1024:            # v5e / v6e: 128 MiB VMEM
        return 96 * 1024 * 1024, 24 * 1024 * 1024
    return 48 * 1024 * 1024, 12 * 1024 * 1024     # v7x: 64 MiB per core


def _pick_tile_hw(hw, per_lane_bytes, tile_budget, max_tile_hw=None):
    """Spatial (lane) tile: a multiple of 128, within the VMEM tile budget.

    hw does NOT need to be a multiple of the tile -- callers use cdiv grids,
    masking (reductions) or Pallas's dropped OOB stores (elementwise maps)."""
    hw_pad = ((hw + 127) // 128) * 128
    max_lanes = max(128, (tile_budget // max(per_lane_bytes, 1)) // 128 * 128)
    tile = min(hw_pad, max_lanes)
    if max_tile_hw is not None:
        tile = min(tile, max(128, (max_tile_hw // 128) * 128))
    return tile


# --------------------------------------------------------------------------
# Kernels
# --------------------------------------------------------------------------
def _make_stats_kernel(hw, tile_hw, n_hw_grid, split, need_mask):
    """Phase 1: accumulate per-sample [sum(x) | Gram(x)] with x = [x0; x1].

    Output block (resident accumulator across the 'arbitrary' axis):
      stats[p] = [[G00, G01, s0],
                  [G10, G11, s1]]           shape [2C, 2C + 1], f32
    """

    def kernel(x0_ref, x1_ref, s_ref):
        t = pl.program_id(1)

        @pl.when(t == 0)
        def _():
            s_ref[...] = jnp.zeros_like(s_ref)

        x0 = x0_ref[0]                                   # [C, tile_hw]
        x1 = x1_ref[0]

        if need_mask:
            p = pl.program_id(0)
            chunk = (p % split) if split > 1 else 0
            t_abs = chunk * n_hw_grid + t
            valid = hw - t_abs * tile_hw
            lane = jax.lax.broadcasted_iota(jnp.int32, (1, tile_hw), 1)
            keep = lane < valid
            x0 = jnp.where(keep, x0, jnp.zeros_like(x0))
            x1 = jnp.where(keep, x1, jnp.zeros_like(x1))

        dims = (((1,), (1,)), ((), ()))                  # contract the lane axis
        g00 = jax.lax.dot_general(x0, x0, dims, preferred_element_type=jnp.float32)
        g01 = jax.lax.dot_general(x0, x1, dims, preferred_element_type=jnp.float32)
        g10 = jax.lax.dot_general(x1, x0, dims, preferred_element_type=jnp.float32)
        g11 = jax.lax.dot_general(x1, x1, dims, preferred_element_type=jnp.float32)
        s0 = jnp.sum(x0.astype(jnp.float32), axis=1, keepdims=True)
        s1 = jnp.sum(x1.astype(jnp.float32), axis=1, keepdims=True)

        top = jnp.concatenate([g00, g01, s0], axis=1)    # [C, 2C+1]
        bot = jnp.concatenate([g10, g11, s1], axis=1)    # [C, 2C+1]
        s_ref[0] = s_ref[0] + jnp.concatenate([top, bot], axis=0)

    return kernel


def _norm_kernel(x0_ref, x1_ref, w00_ref, w01_ref, w10_ref, w11_ref,
                 sh0_ref, sh1_ref, o0_ref, o1_ref):
    """Phase 2: y_t = W_t0 x0 + W_t1 x1 (BN scale folded into W), + shift, ReLU.

    Writes the two task outputs directly (lane-dense), no wrapper slicing."""
    x0 = x0_ref[0]                                       # [C, tile_hw]
    x1 = x1_ref[0]
    y0 = (jnp.dot(w00_ref[...], x0, preferred_element_type=jnp.float32)
          + jnp.dot(w01_ref[...], x1, preferred_element_type=jnp.float32))
    y1 = (jnp.dot(w10_ref[...], x0, preferred_element_type=jnp.float32)
          + jnp.dot(w11_ref[...], x1, preferred_element_type=jnp.float32))
    o0_ref[0] = jnp.maximum(y0 + sh0_ref[...], 0.0).astype(o0_ref.dtype)
    o1_ref[0] = jnp.maximum(y1 + sh1_ref[...], 0.0).astype(o1_ref.dtype)


def _make_fused_kernel(n, hw, c):
    """Small-problem fast path: everything resident in VMEM, one HBM pass.

    Computes y for all samples, exact centered batch stats, then normalizes."""
    inv_m = 1.0 / float(n * hw)

    def kernel(x0_ref, x1_ref, w00_ref, w01_ref, w10_ref, w11_ref,
               g0_ref, b0_ref, g1_ref, b1_ref, o0_ref, o1_ref):
        y0s, y1s = [], []
        s0 = jnp.zeros((c, 1), jnp.float32)
        s1 = jnp.zeros((c, 1), jnp.float32)
        for i in range(n):                               # static, small n
            x0 = x0_ref[i]
            x1 = x1_ref[i]
            y0 = (jnp.dot(w00_ref[...], x0, preferred_element_type=jnp.float32)
                  + jnp.dot(w01_ref[...], x1, preferred_element_type=jnp.float32))
            y1 = (jnp.dot(w10_ref[...], x0, preferred_element_type=jnp.float32)
                  + jnp.dot(w11_ref[...], x1, preferred_element_type=jnp.float32))
            y0s.append(y0)
            y1s.append(y1)
            s0 = s0 + jnp.sum(y0, axis=1, keepdims=True)
            s1 = s1 + jnp.sum(y1, axis=1, keepdims=True)

        mean0 = s0 * inv_m
        mean1 = s1 * inv_m
        v0 = jnp.zeros_like(mean0)
        v1 = jnp.zeros_like(mean1)
        for i in range(n):
            d0 = y0s[i] - mean0
            d1 = y1s[i] - mean1
            v0 = v0 + jnp.sum(d0 * d0, axis=1, keepdims=True)
            v1 = v1 + jnp.sum(d1 * d1, axis=1, keepdims=True)

        scale0 = g0_ref[...] * jax.lax.rsqrt(v0 * inv_m + BN_EPS)
        scale1 = g1_ref[...] * jax.lax.rsqrt(v1 * inv_m + BN_EPS)
        shift0 = b0_ref[...] - mean0 * scale0
        shift1 = b1_ref[...] - mean1 * scale1
        for i in range(n):
            o0_ref[i] = jnp.maximum(y0s[i] * scale0 + shift0, 0.0).astype(o0_ref.dtype)
            o1_ref[i] = jnp.maximum(y1s[i] * scale1 + shift1, 0.0).astype(o1_ref.dtype)

    return kernel


# --------------------------------------------------------------------------
# Parameters (mirrors NDDRLayer.__init__)
# --------------------------------------------------------------------------
def make_nddr_weights(hidden_dim, num_tasks, alpha=0.9, beta=0.1,
                      dtype=jnp.float32):
    """Fused conv weight [T*C, T*C]; row block i is task i's 1x1 conv weight:
    alpha on the diagonal of its own input-channel block, beta on the
    diagonals of the other blocks."""
    eye = jnp.eye(hidden_dim, dtype=dtype)
    rows = []
    for i in range(num_tasks):
        blocks = [(alpha if j == i else beta) * eye for j in range(num_tasks)]
        rows.append(jnp.concatenate(blocks, axis=1))      # [C, T*C]
    return jnp.concatenate(rows, axis=0)                  # [T*C, T*C]


# --------------------------------------------------------------------------
# Forward
# --------------------------------------------------------------------------
def nddr_forward(features, w, gamma, beta, *, force_two_phase=False,
                 max_tile_hw=None):
    """features: list of 2 NCHW arrays [N, C, H, W] (the module is 2-task).
    w: [2C, 2C] fused conv weight. gamma/beta: [2C] BN affine params."""
    assert len(features) == 2, "NDDRLayer forward is defined for two tasks"
    f0, f1 = features
    assert f0.shape == f1.shape and f0.dtype == f1.dtype
    N, C, H, W = f0.shape
    TC = 2 * C
    HW = H * W
    dtype = f0.dtype
    bpe = jnp.dtype(dtype).itemsize

    # Pure views: channels on sublanes (full extent -> no alignment demands),
    # the large spatial axis on lanes.  No HBM copies.
    x0 = f0.reshape(N, C, HW)
    x1 = f1.reshape(N, C, HW)

    Wf = w.astype(jnp.float32)
    gf = gamma.astype(jnp.float32)
    bf = beta.astype(jnp.float32)

    vmem_limit, tile_budget = _budgets()

    # ---------------- small-problem fast path (single fused kernel) --------
    fused_bytes = N * HW * (2 * C * bpe      # both input features
                            + 2 * C * bpe    # both outputs
                            + TC * 4)        # resident f32 y
    if (not force_two_phase) and fused_bytes <= min(tile_budget, 8 * 1024 * 1024):
        w00, w01 = Wf[:C, :C], Wf[:C, C:]
        w10, w11 = Wf[C:, :C], Wf[C:, C:]
        g0, b0 = gf[:C].reshape(C, 1), bf[:C].reshape(C, 1)
        g1, b1 = gf[C:].reshape(C, 1), bf[C:].reshape(C, 1)

        xspec = pl.BlockSpec((N, C, HW), lambda i: (0, 0, 0))
        wspec = pl.BlockSpec((C, C), lambda i: (0, 0))
        vspec = pl.BlockSpec((C, 1), lambda i: (0, 0))

        o0, o1 = pl.pallas_call(
            _make_fused_kernel(N, HW, C),
            out_shape=(jax.ShapeDtypeStruct((N, C, HW), dtype),
                       jax.ShapeDtypeStruct((N, C, HW), dtype)),
            grid_spec=pl.GridSpec(
                grid=(1,),
                in_specs=[xspec, xspec, wspec, wspec, wspec, wspec,
                          vspec, vspec, vspec, vspec],
                out_specs=[xspec, xspec],
            ),
            compiler_params=pltpu.CompilerParams(
                dimension_semantics=("arbitrary",),
                vmem_limit_bytes=vmem_limit),
        )(x0, x1, w00, w01, w10, w11, g0, b0, g1, b1)
        return o0.reshape(N, C, H, W), o1.reshape(N, C, H, W)

    # ---------------- Phase 1: streaming sum(x) + Gram stats ---------------
    # Only x tiles are streamed (stats accumulator is resident) -> per-lane
    # cost is 2 features * C rows * bpe * double-buffer.
    tile_s = _pick_tile_hw(HW, 4 * C * bpe, tile_budget, max_tile_hw)
    n_hw_total = (HW + tile_s - 1) // tile_s
    # v7x: with N == 1 split spatial into two parallel chunks (2 TensorCores).
    split = 2 if (N == 1 and n_hw_total >= 2 and n_hw_total % 2 == 0) else 1
    n_hw_grid = n_hw_total // split
    n_par = N * split
    need_mask = (HW % tile_s) != 0

    if split == 1:
        x_idx_s = lambda p, t: (p, 0, t)
    else:
        x_idx_s = lambda p, t: (p // split, 0, (p % split) * n_hw_grid + t)

    stats = pl.pallas_call(
        _make_stats_kernel(HW, tile_s, n_hw_grid, split, need_mask),
        out_shape=jax.ShapeDtypeStruct((n_par, TC, TC + 1), jnp.float32),
        grid_spec=pl.GridSpec(
            grid=(n_par, n_hw_grid),
            in_specs=[pl.BlockSpec((1, C, tile_s), x_idx_s),
                      pl.BlockSpec((1, C, tile_s), x_idx_s)],
            out_specs=pl.BlockSpec((1, TC, TC + 1), lambda p, t: (p, 0, 0)),
        ),
        compiler_params=pltpu.CompilerParams(
            dimension_semantics=("parallel", "arbitrary"),
            vmem_limit_bytes=vmem_limit),
    )(x0, x1)

    # ---------------- tiny XLA glue: finish reduction, fold BN -------------
    st = stats.sum(axis=0)                         # [TC, TC+1]
    G = st[:, :TC]                                 # Gram of stacked x
    sx = st[:, TC]                                 # sum of stacked x
    m = float(N * HW)
    mean = (Wf @ sx) / m                           # mean of y per channel
    ey2 = jnp.einsum("ij,jk,ik->i", Wf, G, Wf) / m # E[y^2] = diag(W G W^T)/m
    var = jnp.maximum(ey2 - mean * mean, 0.0)      # biased var, clamp cancel.
    scale = gf * jax.lax.rsqrt(var + BN_EPS)
    shift = bf - mean * scale
    Ws = Wf * scale[:, None]                       # fold BN scale into weight
    w00, w01 = Ws[:C, :C], Ws[:C, C:]
    w10, w11 = Ws[C:, :C], Ws[C:, C:]
    sh0 = shift[:C].reshape(C, 1)
    sh1 = shift[C:].reshape(C, 1)

    # ---------------- Phase 2: apply (fully parallel, lane-dense stores) ---
    tile_n = _pick_tile_hw(HW, 8 * C * bpe, tile_budget, max_tile_hw)
    n_hw_norm = (HW + tile_n - 1) // tile_n

    xspec = pl.BlockSpec((1, C, tile_n), lambda n, t: (n, 0, t))
    wspec = pl.BlockSpec((C, C), lambda n, t: (0, 0))
    sspec = pl.BlockSpec((C, 1), lambda n, t: (0, 0))
    ospec = pl.BlockSpec((1, C, tile_n), lambda n, t: (n, 0, t))

    o0, o1 = pl.pallas_call(
        _norm_kernel,
        out_shape=(jax.ShapeDtypeStruct((N, C, HW), dtype),
                   jax.ShapeDtypeStruct((N, C, HW), dtype)),
        grid_spec=pl.GridSpec(
            grid=(N, n_hw_norm),
            in_specs=[xspec, xspec, wspec, wspec, wspec, wspec, sspec, sspec],
            out_specs=[ospec, ospec],
        ),
        compiler_params=pltpu.CompilerParams(
            dimension_semantics=("parallel", "parallel"),
            vmem_limit_bytes=vmem_limit),
    )(x0, x1, w00, w01, w10, w11, sh0, sh1)

    return o0.reshape(N, C, H, W), o1.reshape(N, C, H, W)


# --------------------------------------------------------------------------
# Pure-JAX reference (mirrors the PyTorch module in training mode)
# --------------------------------------------------------------------------
def nddr_reference(features, w, gamma, beta):
    num_tasks = len(features)
    x = jnp.concatenate(features, axis=1).astype(jnp.float32)   # [N, TC, H, W]
    N, TC, H, W = x.shape
    C = TC // num_tasks
    y = jnp.einsum("oc,nchw->nohw", w.astype(jnp.float32), x)
    mean = jnp.mean(y, axis=(0, 2, 3), keepdims=True)
    var = jnp.mean((y - mean) ** 2, axis=(0, 2, 3), keepdims=True)  # biased
    yn = (y - mean) * jax.lax.rsqrt(var + BN_EPS)
    yn = yn * gamma.reshape(1, TC, 1, 1) + beta.reshape(1, TC, 1, 1)
    out = jnp.maximum(yn, 0.0)
    return out[:, :C], out[:, C:]


if __name__ == "__main__":
    num_tasks = 2
    key = jax.random.PRNGKey(0)
    k0, k1, k2, k3 = jax.random.split(key, 4)

    # --- Test 1: small shapes (fused fast path) ----------------------------
    hidden_dim, N, H, W = 4, 2, 16, 16
    feats = [jax.random.normal(k0, (N, hidden_dim, H, W), jnp.float32),
             jax.random.normal(k1, (N, hidden_dim, H, W), jnp.float32)]
    w = make_nddr_weights(hidden_dim, num_tasks, alpha=0.9, beta=0.1)
    gamma = jnp.ones((num_tasks * hidden_dim,), jnp.float32)
    beta_bn = jnp.zeros((num_tasks * hidden_dim,), jnp.float32)

    fwd = jax.jit(nddr_forward)
    a1, a2 = fwd(feats, w, gamma, beta_bn)
    jax.block_until_ready((a1, a2))
    r1, r2 = nddr_reference(feats, w, gamma, beta_bn)
    assert a1.shape == (N, hidden_dim, H, W) and a2.shape == (N, hidden_dim, H, W)
    assert jnp.allclose(a1, r1, atol=2e-4, rtol=2e-4)
    assert jnp.allclose(a2, r2, atol=2e-4, rtol=2e-4)

    # --- Test 2: streaming two-phase path with a ragged (non-128) tail -----
    hd2, N2, H2, W2 = 8, 2, 24, 20                   # HW = 480 (not /128)
    f0 = jax.random.normal(k2, (N2, hd2, H2, W2), jnp.float32)
    f1 = jax.random.normal(k3, (N2, hd2, H2, W2), jnp.float32)
    w2 = make_nddr_weights(hd2, num_tasks)
    g2 = jnp.ones((num_tasks * hd2,), jnp.float32)
    b2 = jnp.zeros((num_tasks * hd2,), jnp.float32)
    fwd2 = jax.jit(functools.partial(nddr_forward, force_two_phase=True,
                                     max_tile_hw=256))
    t1, t2 = fwd2([f0, f1], w2, g2, b2)
    jax.block_until_ready((t1, t2))
    rt1, rt2 = nddr_reference([f0, f1], w2, g2, b2)
    assert jnp.allclose(t1, rt1, atol=2e-4, rtol=2e-4)
    assert jnp.allclose(t2, rt2, atol=2e-4, rtol=2e-4)

    # --- Test 3: N == 1 exercises the spatial-parallel split (v7x) ---------
    u1, u2 = fwd2([f0[:1], f1[:1]], w2, g2, b2)
    jax.block_until_ready((u1, u2))
    ru1, ru2 = nddr_reference([f0[:1], f1[:1]], w2, g2, b2)
    assert jnp.allclose(u1, ru1, atol=2e-4, rtol=2e-4)
    assert jnp.allclose(u2, ru2, atol=2e-4, rtol=2e-4)

    print("KERNEL_OK")
</pallas_src>

<mosaic_0001>
module attributes {stable_mosaic.version = 11 : i64} {
  func.func @kernel(%arg0: i32, %arg1: memref<2x4x256xf32, #tpu.memory_space<vmem>>, %arg2: memref<2x4x256xf32, #tpu.memory_space<vmem>>, %arg3: memref<4x4xf32, #tpu.memory_space<vmem>>, %arg4: memref<4x4xf32, #tpu.memory_space<vmem>>, %arg5: memref<4x4xf32, #tpu.memory_space<vmem>>, %arg6: memref<4x4xf32, #tpu.memory_space<vmem>>, %arg7: memref<4x1xf32, #tpu.memory_space<vmem>>, %arg8: memref<4x1xf32, #tpu.memory_space<vmem>>, %arg9: memref<4x1xf32, #tpu.memory_space<vmem>>, %arg10: memref<4x1xf32, #tpu.memory_space<vmem>>, %arg11: memref<2x4x256xf32, #tpu.memory_space<vmem>>, %arg12: memref<2x4x256xf32, #tpu.memory_space<vmem>>) attributes {dimension_semantics = [#tpu.dimension_semantics<arbitrary>], iteration_bounds = array<i64: 1>, scalar_prefetch = 0 : i64, scratch_operands = 0 : i64, tpu.core_type = #tpu.core_type<tc>, window_params = [{pipeline_mode = #tpu.pipeline_mode<synchronous>, transform_indices = @transform_0, window_bounds = array<i64: 2, 4, 256>}, {pipeline_mode = #tpu.pipeline_mode<synchronous>, transform_indices = @transform_1, window_bounds = array<i64: 2, 4, 256>}, {pipeline_mode = #tpu.pipeline_mode<synchronous>, transform_indices = @transform_2, window_bounds = array<i64: 4, 4>}, {pipeline_mode = #tpu.pipeline_mode<synchronous>, transform_indices = @transform_3, window_bounds = array<i64: 4, 4>}, {pipeline_mode = #tpu.pipeline_mode<synchronous>, transform_indices = @transform_4, window_bounds = array<i64: 4, 4>}, {pipeline_mode = #tpu.pipeline_mode<synchronous>, transform_indices = @transform_5, window_bounds = array<i64: 4, 4>}, {pipeline_mode = #tpu.pipeline_mode<synchronous>, transform_indices = @transform_6, window_bounds = array<i64: 4, 1>}, {pipeline_mode = #tpu.pipeline_mode<synchronous>, transform_indices = @transform_7, window_bounds = array<i64: 4, 1>}, {pipeline_mode = #tpu.pipeline_mode<synchronous>, transform_indices = @transform_8, window_bounds = array<i64: 4, 1>}, {pipeline_mode = #tpu.pipeline_mode<synchronous>, transform_indices = @transform_9, window_bounds = array<i64: 4, 1>}, {pipeline_mode = #tpu.pipeline_mode<synchronous>, transform_indices = @transform_10, window_bounds = array<i64: 2, 4, 256>}, {pipeline_mode = #tpu.pipeline_mode<synchronous>, transform_indices = @transform_11, window_bounds = array<i64: 2, 4, 256>}]} {
    %cst = arith.constant 0.000000e+00 : f32
    %0 = vector.broadcast %cst : f32 to vector<4x1xf32>
    %cst_0 = arith.constant 0.000000e+00 : f32
    %1 = vector.broadcast %cst_0 : f32 to vector<4x1xf32>
    %c0 = arith.constant 0 : index
    %c0_1 = arith.constant 0 : index
    %c0_2 = arith.constant 0 : index
    %2 = vector.load %arg1[%c0, %c0_1, %c0_2] : memref<2x4x256xf32, #tpu.memory_space<vmem>>, vector<1x4x256xf32>
    %3 = vector.shape_cast %2 : vector<1x4x256xf32> to vector<4x256xf32>
    %c0_3 = arith.constant 0 : index
    %c0_4 = arith.constant 0 : index
    %c0_5 = arith.constant 0 : index
    %4 = vector.load %arg2[%c0_3, %c0_4, %c0_5] : memref<2x4x256xf32, #tpu.memory_space<vmem>>, vector<1x4x256xf32>
    %5 = vector.shape_cast %4 : vector<1x4x256xf32> to vector<4x256xf32>
    %c0_6 = arith.constant 0 : index
    %c0_7 = arith.constant 0 : index
    %6 = vector.load %arg3[%c0_6, %c0_7] : memref<4x4xf32, #tpu.memory_space<vmem>>, vector<4x4xf32>
    %cst_8 = arith.constant dense<0.000000e+00> : vector<4x256xf32>
    %7 = tpu.matmul %6, %3, %cst_8 {dimension_numbers = #tpu.dot_dimension_numbers<[1], [0], [0], [1], [0, 0, 1, 1], [], []>} : vector<4x4xf32>, vector<4x256xf32>, vector<4x256xf32> -> vector<4x256xf32>
    %c0_9 = arith.constant 0 : index
    %c0_10 = arith.constant 0 : index
    %8 = vector.load %arg4[%c0_9, %c0_10] : memref<4x4xf32, #tpu.memory_space<vmem>>, vector<4x4xf32>
    %cst_11 = arith.constant dense<0.000000e+00> : vector<4x256xf32>
    %9 = tpu.matmul %8, %5, %cst_11 {dimension_numbers = #tpu.dot_dimension_numbers<[1], [0], [0], [1], [0, 0, 1, 1], [], []>} : vector<4x4xf32>, vector<4x256xf32>, vector<4x256xf32> -> vector<4x256xf32>
    %10 = arith.addf %7, %9 : vector<4x256xf32>
    %c0_12 = arith.constant 0 : index
    %c0_13 = arith.constant 0 : index
    %11 = vector.load %arg5[%c0_12, %c0_13] : memref<4x4xf32, #tpu.memory_space<vmem>>, vector<4x4xf32>
    %cst_14 = arith.constant dense<0.000000e+00> : vector<4x256xf32>
    %12 = tpu.matmul %11, %3, %cst_14 {dimension_numbers = #tpu.dot_dimension_numbers<[1], [0], [0], [1], [0, 0, 1, 1], [], []>} : vector<4x4xf32>, vector<4x256xf32>, vector<4x256xf32> -> vector<4x256xf32>
    %c0_15 = arith.constant 0 : index
    %c0_16 = arith.constant 0 : index
    %13 = vector.load %arg6[%c0_15, %c0_16] : memref<4x4xf32, #tpu.memory_space<vmem>>, vector<4x4xf32>
    %cst_17 = arith.constant dense<0.000000e+00> : vector<4x256xf32>
    %14 = tpu.matmul %13, %5, %cst_17 {dimension_numbers = #tpu.dot_dimension_numbers<[1], [0], [0], [1], [0, 0, 1, 1], [], []>} : vector<4x4xf32>, vector<4x256xf32>, vector<4x256xf32> -> vector<4x256xf32>
    %15 = arith.addf %12, %14 : vector<4x256xf32>
    %cst_18 = arith.constant dense<0.000000e+00> : vector<4xf32>
    %16 = vector.multi_reduction <add>, %10, %cst_18 [1] : vector<4x256xf32> to vector<4xf32>
    %17 = vector.shape_cast %16 : vector<4xf32> to vector<4x1xf32>
    %18 = arith.addf %0, %17 : vector<4x1xf32>
    %cst_19 = arith.constant dense<0.000000e+00> : vector<4xf32>
    %19 = vector.multi_reduction <add>, %15, %cst_19 [1] : vector<4x256xf32> to vector<4xf32>
    %20 = vector.shape_cast %19 : vector<4xf32> to vector<4x1xf32>
    %21 = arith.addf %1, %20 : vector<4x1xf32>
    %c1 = arith.constant 1 : index
    %c0_20 = arith.constant 0 : index
    %c0_21 = arith.constant 0 : index
    %22 = vector.load %arg1[%c1, %c0_20, %c0_21] : memref<2x4x256xf32, #tpu.memory_space<vmem>>, vector<1x4x256xf32>
    %23 = vector.shape_cast %22 : vector<1x4x256xf32> to vector<4x256xf32>
    %c1_22 = arith.constant 1 : index
    %c0_23 = arith.constant 0 : index
    %c0_24 = arith.constant 0 : index
    %24 = vector.load %arg2[%c1_22, %c0_23, %c0_24] : memref<2x4x256xf32, #tpu.memory_space<vmem>>, vector<1x4x256xf32>
    %25 = vector.shape_cast %24 : vector<1x4x256xf32> to vector<4x256xf32>
    %c0_25 = arith.constant 0 : index
    %c0_26 = arith.constant 0 : index
    %26 = vector.load %arg3[%c0_25, %c0_26] : memref<4x4xf32, #tpu.memory_space<vmem>>, vector<4x4xf32>
    %cst_27 = arith.constant dense<0.000000e+00> : vector<4x256xf32>
    %27 = tpu.matmul %26, %23, %cst_27 {dimension_numbers = #tpu.dot_dimension_numbers<[1], [0], [0], [1], [0, 0, 1, 1], [], []>} : vector<4x4xf32>, vector<4x256xf32>, vector<4x256xf32> -> vector<4x256xf32>
    %c0_28 = arith.constant 0 : index
    %c0_29 = arith.constant 0 : index
    %28 = vector.load %arg4[%c0_28, %c0_29] : memref<4x4xf32, #tpu.memory_space<vmem>>, vector<4x4xf32>
    %cst_30 = arith.constant dense<0.000000e+00> : vector<4x256xf32>
    %29 = tpu.matmul %28, %25, %cst_30 {dimension_numbers = #tpu.dot_dimension_numbers<[1], [0], [0], [1], [0, 0, 1, 1], [], []>} : vector<4x4xf32>, vector<4x256xf32>, vector<4x256xf32> -> vector<4x256xf32>
    %30 = arith.addf %27, %29 : vector<4x256xf32>
    %c0_31 = arith.constant 0 : index
    %c0_32 = arith.constant 0 : index
    %31 = vector.load %arg5[%c0_31, %c0_32] : memref<4x4xf32, #tpu.memory_space<vmem>>, vector<4x4xf32>
    %cst_33 = arith.constant dense<0.000000e+00> : vector<4x256xf32>
    %32 = tpu.matmul %31, %23, %cst_33 {dimension_numbers = #tpu.dot_dimension_numbers<[1], [0], [0], [1], [0, 0, 1, 1], [], []>} : vector<4x4xf32>, vector<4x256xf32>, vector<4x256xf32> -> vector<4x256xf32>
    %c0_34 = arith.constant 0 : index
    %c0_35 = arith.constant 0 : index
    %33 = vector.load %arg6[%c0_34, %c0_35] : memref<4x4xf32, #tpu.memory_space<vmem>>, vector<4x4xf32>
    %cst_36 = arith.constant dense<0.000000e+00> : vector<4x256xf32>
    %34 = tpu.matmul %33, %25, %cst_36 {dimension_numbers = #tpu.dot_dimension_numbers<[1], [0], [0], [1], [0, 0, 1, 1], [], []>} : vector<4x4xf32>, vector<4x256xf32>, vector<4x256xf32> -> vector<4x256xf32>
    %35 = arith.addf %32, %34 : vector<4x256xf32>
    %cst_37 = arith.constant dense<0.000000e+00> : vector<4xf32>
    %36 = vector.multi_reduction <add>, %30, %cst_37 [1] : vector<4x256xf32> to vector<4xf32>
    %37 = vector.shape_cast %36 : vector<4xf32> to vector<4x1xf32>
    %38 = arith.addf %18, %37 : vector<4x1xf32>
    %cst_38 = arith.constant dense<0.000000e+00> : vector<4xf32>
    %39 = vector.multi_reduction <add>, %35, %cst_38 [1] : vector<4x256xf32> to vector<4xf32>
    %40 = vector.shape_cast %39 : vector<4xf32> to vector<4x1xf32>
    %41 = arith.addf %21, %40 : vector<4x1xf32>
    %cst_39 = arith.constant 0.001953125 : f32
    %42 = vector.broadcast %cst_39 : f32 to vector<4x1xf32>
    %43 = arith.mulf %38, %42 : vector<4x1xf32>
    %cst_40 = arith.constant 0.001953125 : f32
    %44 = vector.broadcast %cst_40 : f32 to vector<4x1xf32>
    %45 = arith.mulf %41, %44 : vector<4x1xf32>
    %cst_41 = arith.constant 0.000000e+00 : f32
    %46 = vector.broadcast %cst_41 : f32 to vector<4x1xf32>
    %cst_42 = arith.constant 0.000000e+00 : f32
    %47 = vector.broadcast %cst_42 : f32 to vector<4x1xf32>
    %48 = vector.broadcast %43 : vector<4x1xf32> to vector<4x256xf32>
    %49 = arith.subf %10, %48 : vector<4x256xf32>
    %50 = vector.broadcast %45 : vector<4x1xf32> to vector<4x256xf32>
    %51 = arith.subf %15, %50 : vector<4x256xf32>
    %52 = arith.mulf %49, %49 : vector<4x256xf32>
    %cst_43 = arith.constant dense<0.000000e+00> : vector<4xf32>
    %53 = vector.multi_reduction <add>, %52, %cst_43 [1] : vector<4x256xf32> to vector<4xf32>
    %54 = vector.shape_cast %53 : vector<4xf32> to vector<4x1xf32>
    %55 = arith.addf %46, %54 : vector<4x1xf32>
    %56 = arith.mulf %51, %51 : vector<4x256xf32>
    %cst_44 = arith.constant dense<0.000000e+00> : vector<4xf32>
    %57 = vector.multi_reduction <add>, %56, %cst_44 [1] : vector<4x256xf32> to vector<4xf32>
    %58 = vector.shape_cast %57 : vector<4xf32> to vector<4x1xf32>
    %59 = arith.addf %47, %58 : vector<4x1xf32>
    %60 = vector.broadcast %43 : vector<4x1xf32> to vector<4x256xf32>
    %61 = arith.subf %30, %60 : vector<4x256xf32>
    %62 = vector.broadcast %45 : vector<4x1xf32> to vector<4x256xf32>
    %63 = arith.subf %35, %62 : vector<4x256xf32>
    %64 = arith.mulf %61, %61 : vector<4x256xf32>
    %cst_45 = arith.constant dense<0.000000e+00> : vector<4xf32>
    %65 = vector.multi_reduction <add>, %64, %cst_45 [1] : vector<4x256xf32> to vector<4xf32>
    %66 = vector.shape_cast %65 : vector<4xf32> to vector<4x1xf32>
    %67 = arith.addf %55, %66 : vector<4x1xf32>
    %68 = arith.mulf %63, %63 : vector<4x256xf32>
    %cst_46 = arith.constant dense<0.000000e+00> : vector<4xf32>
    %69 = vector.multi_reduction <add>, %68, %cst_46 [1] : vector<4x256xf32> to vector<4xf32>
    %70 = vector.shape_cast %69 : vector<4xf32> to vector<4x1xf32>
    %71 = arith.addf %59, %70 : vector<4x1xf32>
    %c0_47 = arith.constant 0 : index
    %c0_48 = arith.constant 0 : index
    %72 = vector.load %arg7[%c0_47, %c0_48] : memref<4x1xf32, #tpu.memory_space<vmem>>, vector<4x1xf32>
    %cst_49 = arith.constant 0.001953125 : f32
    %73 = vector.broadcast %cst_49 : f32 to vector<4x1xf32>
    %74 = arith.mulf %67, %73 : vector<4x1xf32>
    %cst_50 = arith.constant 9.99999974E-6 : f32
    %75 = vector.broadcast %cst_50 : f32 to vector<4x1xf32>
    %76 = arith.addf %74, %75 : vector<4x1xf32>
    %77 = math.rsqrt %76 : vector<4x1xf32>
    %78 = arith.mulf %72, %77 : vector<4x1xf32>
    %c0_51 = arith.constant 0 : index
    %c0_52 = arith.constant 0 : index
    %79 = vector.load %arg9[%c0_51, %c0_52] : memref<4x1xf32, #tpu.memory_space<vmem>>, vector<4x1xf32>
    %cst_53 = arith.constant 0.001953125 : f32
    %80 = vector.broadcast %cst_53 : f32 to vector<4x1xf32>
    %81 = arith.mulf %71, %80 : vector<4x1xf32>
    %cst_54 = arith.constant 9.99999974E-6 : f32
    %82 = vector.broadcast %cst_54 : f32 to vector<4x1xf32>
    %83 = arith.addf %81, %82 : vector<4x1xf32>
    %84 = math.rsqrt %83 : vector<4x1xf32>
    %85 = arith.mulf %79, %84 : vector<4x1xf32>
    %c0_55 = arith.constant 0 : index
    %c0_56 = arith.constant 0 : index
    %86 = vector.load %arg8[%c0_55, %c0_56] : memref<4x1xf32, #tpu.memory_space<vmem>>, vector<4x1xf32>
    %87 = arith.mulf %43, %78 : vector<4x1xf32>
    %88 = arith.subf %86, %87 : vector<4x1xf32>
    %c0_57 = arith.constant 0 : index
    %c0_58 = arith.constant 0 : index
    %89 = vector.load %arg10[%c0_57, %c0_58] : memref<4x1xf32, #tpu.memory_space<vmem>>, vector<4x1xf32>
    %90 = arith.mulf %45, %85 : vector<4x1xf32>
    %91 = arith.subf %89, %90 : vector<4x1xf32>
    %92 = vector.broadcast %78 : vector<4x1xf32> to vector<4x256xf32>
    %93 = arith.mulf %10, %92 : vector<4x256xf32>
    %94 = vector.broadcast %88 : vector<4x1xf32> to vector<4x256xf32>
    %95 = arith.addf %93, %94 : vector<4x256xf32>
    %cst_59 = arith.constant 0.000000e+00 : f32
    %96 = vector.broadcast %cst_59 : f32 to vector<4x256xf32>
    %97 = arith.maximumf %95, %96 : vector<4x256xf32>
    %c0_60 = arith.constant 0 : index
    %c0_61 = arith.constant 0 : index
    %c0_62 = arith.constant 0 : index
    %98 = vector.load %arg11[%c0_60, %c0_61, %c0_62] : memref<2x4x256xf32, #tpu.memory_space<vmem>>, vector<1x4x256xf32>
    %99 = vector.shape_cast %98 : vector<1x4x256xf32> to vector<4x256xf32>
    %100 = vector.shape_cast %97 : vector<4x256xf32> to vector<1x4x256xf32>
    tpu.vector_store %arg11[%c0_60, %c0_61, %c0_62], %100 {strides = array<i32>} : memref<2x4x256xf32, #tpu.memory_space<vmem>>, vector<1x4x256xf32>,
    %101 = vector.broadcast %85 : vector<4x1xf32> to vector<4x256xf32>
    %102 = arith.mulf %15, %101 : vector<4x256xf32>
    %103 = vector.broadcast %91 : vector<4x1xf32> to vector<4x256xf32>
    %104 = arith.addf %102, %103 : vector<4x256xf32>
    %cst_63 = arith.constant 0.000000e+00 : f32
    %105 = vector.broadcast %cst_63 : f32 to vector<4x256xf32>
    %106 = arith.maximumf %104, %105 : vector<4x256xf32>
    %c0_64 = arith.constant 0 : index
    %c0_65 = arith.constant 0 : index
    %c0_66 = arith.constant 0 : index
    %107 = vector.load %arg12[%c0_64, %c0_65, %c0_66] : memref<2x4x256xf32, #tpu.memory_space<vmem>>, vector<1x4x256xf32>
    %108 = vector.shape_cast %107 : vector<1x4x256xf32> to vector<4x256xf32>
    %109 = vector.shape_cast %106 : vector<4x256xf32> to vector<1x4x256xf32>
    tpu.vector_store %arg12[%c0_64, %c0_65, %c0_66], %109 {strides = array<i32>} : memref<2x4x256xf32, #tpu.memory_space<vmem>>, vector<1x4x256xf32>,
    %110 = vector.broadcast %78 : vector<4x1xf32> to vector<4x256xf32>
    %111 = arith.mulf %30, %110 : vector<4x256xf32>
    %112 = vector.broadcast %88 : vector<4x1xf32> to vector<4x256xf32>
    %113 = arith.addf %111, %112 : vector<4x256xf32>
    %cst_67 = arith.constant 0.000000e+00 : f32
    %114 = vector.broadcast %cst_67 : f32 to vector<4x256xf32>
    %115 = arith.maximumf %113, %114 : vector<4x256xf32>
    %c1_68 = arith.constant 1 : index
    %c0_69 = arith.constant 0 : index
    %c0_70 = arith.constant 0 : index
    %116 = vector.load %arg11[%c1_68, %c0_69, %c0_70] : memref<2x4x256xf32, #tpu.memory_space<vmem>>, vector<1x4x256xf32>
    %117 = vector.shape_cast %116 : vector<1x4x256xf32> to vector<4x256xf32>
    %118 = vector.shape_cast %115 : vector<4x256xf32> to vector<1x4x256xf32>
    tpu.vector_store %arg11[%c1_68, %c0_69, %c0_70], %118 {strides = array<i32>} : memref<2x4x256xf32, #tpu.memory_space<vmem>>, vector<1x4x256xf32>,
    %119 = vector.broadcast %85 : vector<4x1xf32> to vector<4x256xf32>
    %120 = arith.mulf %35, %119 : vector<4x256xf32>
    %121 = vector.broadcast %91 : vector<4x1xf32> to vector<4x256xf32>
    %122 = arith.addf %120, %121 : vector<4x256xf32>
    %cst_71 = arith.constant 0.000000e+00 : f32
    %123 = vector.broadcast %cst_71 : f32 to vector<4x256xf32>
    %124 = arith.maximumf %122, %123 : vector<4x256xf32>
    %c1_72 = arith.constant 1 : index
    %c0_73 = arith.constant 0 : index
    %c0_74 = arith.constant 0 : index
    %125 = vector.load %arg12[%c1_72, %c0_73, %c0_74] : memref<2x4x256xf32, #tpu.memory_space<vmem>>, vector<1x4x256xf32>
    %126 = vector.shape_cast %125 : vector<1x4x256xf32> to vector<4x256xf32>
    %127 = vector.shape_cast %124 : vector<4x256xf32> to vector<1x4x256xf32>
    tpu.vector_store %arg12[%c1_72, %c0_73, %c0_74], %127 {strides = array<i32>} : memref<2x4x256xf32, #tpu.memory_space<vmem>>, vector<1x4x256xf32>,
    return
  }
  func.func @transform_0(%arg0: i32) -> (i32, i32, i32) {
    %c0_i32 = arith.constant 0 : i32
    %c0_i32_0 = arith.constant 0 : i32
    %c0_i32_1 = arith.constant 0 : i32
    %c0_i32_2 = arith.constant 0 : i32
    return %c0_i32, %c0_i32_0, %c0_i32_1 : i32, i32, i32
  }
  func.func @transform_1(%arg0: i32) -> (i32, i32, i32) {
    %c0_i32 = arith.constant 0 : i32
    %c0_i32_0 = arith.constant 0 : i32
    %c0_i32_1 = arith.constant 0 : i32
    %c0_i32_2 = arith.constant 0 : i32
    return %c0_i32, %c0_i32_0, %c0_i32_1 : i32, i32, i32
  }
  func.func @transform_2(%arg0: i32) -> (i32, i32) {
    %c0_i32 = arith.constant 0 : i32
    %c0_i32_0 = arith.constant 0 : i32
    %c0_i32_1 = arith.constant 0 : i32
    return %c0_i32, %c0_i32_0 : i32, i32
  }
  func.func @transform_3(%arg0: i32) -> (i32, i32) {
    %c0_i32 = arith.constant 0 : i32
    %c0_i32_0 = arith.constant 0 : i32
    %c0_i32_1 = arith.constant 0 : i32
    return %c0_i32, %c0_i32_0 : i32, i32
  }
  func.func @transform_4(%arg0: i32) -> (i32, i32) {
    %c0_i32 = arith.constant 0 : i32
    %c0_i32_0 = arith.constant 0 : i32
    %c0_i32_1 = arith.constant 0 : i32
    return %c0_i32, %c0_i32_0 : i32, i32
  }
  func.func @transform_5(%arg0: i32) -> (i32, i32) {
    %c0_i32 = arith.constant 0 : i32
    %c0_i32_0 = arith.constant 0 : i32
    %c0_i32_1 = arith.constant 0 : i32
    return %c0_i32, %c0_i32_0 : i32, i32
  }
  func.func @transform_6(%arg0: i32) -> (i32, i32) {
    %c0_i32 = arith.constant 0 : i32
    %c0_i32_0 = arith.constant 0 : i32
    %c0_i32_1 = arith.constant 0 : i32
    return %c0_i32, %c0_i32_0 : i32, i32
  }
  func.func @transform_7(%arg0: i32) -> (i32, i32) {
    %c0_i32 = arith.constant 0 : i32
    %c0_i32_0 = arith.constant 0 : i32
    %c0_i32_1 = arith.constant 0 : i32
    return %c0_i32, %c0_i32_0 : i32, i32
  }
  func.func @transform_8(%arg0: i32) -> (i32, i32) {
    %c0_i32 = arith.constant 0 : i32
    %c0_i32_0 = arith.constant 0 : i32
    %c0_i32_1 = arith.constant 0 : i32
    return %c0_i32, %c0_i32_0 : i32, i32
  }
  func.func @transform_9(%arg0: i32) -> (i32, i32) {
    %c0_i32 = arith.constant 0 : i32
    %c0_i32_0 = arith.constant 0 : i32
    %c0_i32_1 = arith.constant 0 : i32
    return %c0_i32, %c0_i32_0 : i32, i32
  }
  func.func @transform_10(%arg0: i32) -> (i32, i32, i32) {
    %c0_i32 = arith.constant 0 : i32
    %c0_i32_0 = arith.constant 0 : i32
    %c0_i32_1 = arith.constant 0 : i32
    %c0_i32_2 = arith.constant 0 : i32
    return %c0_i32, %c0_i32_0, %c0_i32_1 : i32, i32, i32
  }
  func.func @transform_11(%arg0: i32) -> (i32, i32, i32) {
    %c0_i32 = arith.constant 0 : i32
    %c0_i32_0 = arith.constant 0 : i32
    %c0_i32_1 = arith.constant 0 : i32
    %c0_i32_2 = arith.constant 0 : i32
    return %c0_i32, %c0_i32_0, %c0_i32_1 : i32, i32, i32
  }
}

</mosaic_0001>

<llo_original>
// kernel: nddr_forward.1
$region0: #{nddr_forward.1}
  #allocation0 [shape = 'u32[]', space=smem, size = 0x4, offset = 0x4, fixed_abs, tag = 'smem constant byte address 0x4 - core index']
  #allocation1 [shape = 'u32[144,128]{1,0:T(1,128)}', space=vmem, size = 0x12000, scoped, tag = 'internal scratch']
  %s0 = inlined_call_operand.vmem [shape: f32[2,4,256], index: 0, kind: input, shape index: {}]
  %s1 = inlined_call_operand.vmem [shape: f32[2,4,256], index: 1, kind: input, shape index: {}]
  %s2 = inlined_call_operand.vmem [shape: f32[4,4], index: 2, kind: input, shape index: {}]
  %s3 = inlined_call_operand.vmem [shape: f32[4,4], index: 3, kind: input, shape index: {}]
  %s4 = inlined_call_operand.vmem [shape: f32[4,4], index: 4, kind: input, shape index: {}]
  %s5 = inlined_call_operand.vmem [shape: f32[4,4], index: 5, kind: input, shape index: {}]
  %s6 = inlined_call_operand.vmem [shape: f32[4,1], index: 6, kind: input, shape index: {}]
  %s7 = inlined_call_operand.vmem [shape: f32[4,1], index: 7, kind: input, shape index: {}]
  %s8 = inlined_call_operand.vmem [shape: f32[4,1], index: 8, kind: input, shape index: {}]
  %s9 = inlined_call_operand.vmem [shape: f32[4,1], index: 9, kind: input, shape index: {}]
  %s10 = inlined_call_operand.vmem [shape: f32[2,4,256], index: 10, kind: output, shape index: {0}]
  %s11 = inlined_call_operand.vmem [shape: f32[2,4,256], index: 11, kind: output, shape index: {1}]
  %12 = xla_tuple %s10, %s11
  %s13 = sld [smem:[#allocation0]]
  $region58: #{nddr_forward.1} parent=0
    _
  %s15 = ssub.s32 1, %s13
  %s16 = scalar_select 0, %s15, %s13
  // Predicated region
  $region2: #{nddr_forward.1} parent=0 // pred_check
    _
  $region3: #{nddr_forward.1} parent=0 // pred_check_branch
    %18 = sbr.rel (0) target = $region5
  $region4: #{nddr_forward.1} parent=0 // pred_region
    _
  $region5: #{nddr_forward.1} parent=0 // pred_fallthru
    _
  // Predicated region
  $region6: #{nddr_forward.1} parent=0 // pred_check
    _
  $region7: #{nddr_forward.1} parent=0 // pred_check_branch
    %20 = sbr.rel (0) target = $region9
  $region8: #{nddr_forward.1} parent=0 // pred_region
    _
  $region9: #{nddr_forward.1} parent=0 // pred_fallthru
    _
  // Predicated region
  $region10: #{nddr_forward.1} parent=0 // pred_check
    _
  $region11: #{nddr_forward.1} parent=0 // pred_check_branch
    %22 = sbr.rel (0) target = $region13
  $region12: #{nddr_forward.1} parent=0 // pred_region
    _
  $region13: #{nddr_forward.1} parent=0 // pred_fallthru
    _
  // Predicated region
  $region14: #{nddr_forward.1} parent=0 // pred_check
    _
  $region15: #{nddr_forward.1} parent=0 // pred_check_branch
    %24 = sbr.rel (0) target = $region17
  $region16: #{nddr_forward.1} parent=0 // pred_region
    _
  $region17: #{nddr_forward.1} parent=0 // pred_fallthru
    _
  // Predicated region
  $region18: #{nddr_forward.1} parent=0 // pred_check
    _
  $region19: #{nddr_forward.1} parent=0 // pred_check_branch
    %26 = sbr.rel (0) target = $region21
  $region20: #{nddr_forward.1} parent=0 // pred_region
    _
  $region21: #{nddr_forward.1} parent=0 // pred_fallthru
    _
  // Predicated region
  $region22: #{nddr_forward.1} parent=0 // pred_check
    _
  $region23: #{nddr_forward.1} parent=0 // pred_check_branch
    %28 = sbr.rel (0) target = $region25
  $region24: #{nddr_forward.1} parent=0 // pred_region
    _
  $region25: #{nddr_forward.1} parent=0 // pred_fallthru
    _
  // Predicated region
  $region26: #{nddr_forward.1} parent=0 // pred_check
    _
  $region27: #{nddr_forward.1} parent=0 // pred_check_branch
    %30 = sbr.rel (0) target = $region29
  $region28: #{nddr_forward.1} parent=0 // pred_region
    _
  $region29: #{nddr_forward.1} parent=0 // pred_fallthru
    _
  // Predicated region
  $region30: #{nddr_forward.1} parent=0 // pred_check
    _
  $region31: #{nddr_forward.1} parent=0 // pred_check_branch
    %32 = sbr.rel (0) target = $region33
  $region32: #{nddr_forward.1} parent=0 // pred_region
    _
  $region33: #{nddr_forward.1} parent=0 // pred_fallthru
    _
  // Predicated region
  $region34: #{nddr_forward.1} parent=0 // pred_check
    _
  $region35: #{nddr_forward.1} parent=0 // pred_check_branch
    %34 = sbr.rel (0) target = $region37
  $region36: #{nddr_forward.1} parent=0 // pred_region
    _
  $region37: #{nddr_forward.1} parent=0 // pred_fallthru
    _
  // Predicated region
  $region38: #{nddr_forward.1} parent=0 // pred_check
    _
  $region39: #{nddr_forward.1} parent=0 // pred_check_branch
    %36 = sbr.rel (0) target = $region41
  $region40: #{nddr_forward.1} parent=0 // pred_region
    _
  $region41: #{nddr_forward.1} parent=0 // pred_fallthru
    _
  %v37 = vld [vmem:[%s0] sm:$0xff]
  %v38 = vld [vmem:[%s1] sm:$0xff]
  %v39 = vld [vmem:[%s2] sm:$0xf]
  %v40 = vld [vmem:[%s3] sm:$0xf]
  %v42 = vcombine.high %v38, %v38
  %vm43 = vcmask 31744
  %v45 = vsel %vm43, %v40, 0
  %vm47 = vcmask 1043456
  %v48 = vsel %vm47, %v38, 0
  %v50 = vsel %vm47, %v42, 0
  %52 = vmatprep.subr.mxu0 %v50
  %53 = vmatpush1.msra.mxu0 %v48
  %54 = vmatprep.subr.mxu0 0.0
  %55 = vmatpush1.msra.mxu0 0.0
  %56 = vmatprep.subr.mxu0 0.0
  %57 = vmatpush1.msra.mxu0 0.0
  %58 = vmatprep.subr.mxu0 0.0
  %59 = vmatpush1.msra.mxu0 0.0
  %60 = vmatprep.subr.mxu0 0.0
  %61 = vmatpush1.msra.mxu0 0.0
  %62 = vmatprep.subr.mxu0 0.0
  %63 = vmatpush1.msra.mxu0 0.0
  %64 = vmatprep.subr.mxu0 0.0
  %65 = vmatpush1.msra.mxu0 0.0
  %66 = vmatprep.subr.mxu0 0.0
  %67 = vmatpush1.msra.mxu0 0.0
  %68 = vmatprep.subr.mxu0 0.0
  %69 = vmatpush1.msra.mxu0 0.0
  %70 = vmatprep.subr.mxu0 0.0
  %71 = vmatpush1.msra.mxu0 0.0
  %72 = vmatprep.subr.mxu0 0.0
  %73 = vmatpush1.msra.mxu0 0.0
  %74 = vmatprep.subr.mxu0 0.0
  %75 = vmatpush1.msra.mxu0 0.0
  %76 = vmatprep.subr.mxu0 0.0
  %77 = vmatpush1.msra.mxu0 0.0
  %78 = vmatprep.subr.mxu0 0.0
  %79 = vmatpush1.msra.mxu0 0.0
  %80 = vmatprep.subr.mxu0 0.0
  %81 = vmatpush1.msra.mxu0 0.0
  %82 = vmatprep.subr.mxu0 0.0
  %83 = vmatpush1.msra.mxu0 0.0
  %84 = vmatprep.subr.mxu0 0.0
  %85 = vmatpush1.msra.mxu0 0.0
  %86 = vmatprep.subr.mxu0 0.0
  %87 = vmatpush1.msra.mxu0 0.0
  %88 = vmatprep.subr.mxu0 0.0
  %89 = vmatpush1.msra.mxu0 0.0
  %90 = vmatprep.subr.mxu0 0.0
  %91 = vmatpush1.msra.mxu0 0.0
  %92 = vmatprep.subr.mxu0 0.0
  %93 = vmatpush1.msra.mxu0 0.0
  %94 = vmatprep.subr.mxu0 0.0
  %95 = vmatpush1.msra.mxu0 0.0
  %96 = vmatprep.subr.mxu0 0.0
  %97 = vmatpush1.msra.mxu0 0.0
  %98 = vmatprep.subr.mxu0 0.0
  %99 = vmatpush1.msra.mxu0 0.0
  %100 = vmatprep.subr.mxu0 0.0
  %101 = vmatpush1.msra.mxu0 0.0
  %102 = vmatprep.subr.mxu0 0.0
  %103 = vmatpush1.msra.mxu0 0.0
  %104 = vmatprep.subr.mxu0 0.0
  %105 = vmatpush1.msra.mxu0 0.0
  %106 = vmatprep.subr.mxu0 0.0
  %107 = vmatpush1.msra.mxu0 0.0
  %108 = vmatprep.subr.mxu0 0.0
  %109 = vmatpush1.msra.mxu0 0.0
  %110 = vmatprep.subr.mxu0 0.0
  %111 = vmatpush1.msra.mxu0 0.0
  %112 = vmatprep.subr.mxu0 0.0
  %113 = vmatpush1.msra.mxu0 0.0
  %114 = vmatprep.subr.mxu0 0.0
  %115 = vmatpush1.msra.mxu0 0.0
  %116 = vmatprep.mubr.f32.mxu0 0.0
  %117 = vmatmul.mubr.f32.gmra.mrb[0].mxu0 %v45
  %v118 = vpop.f32.mrb[0].mxu0
  %v119 = vadd.f32 0.0, %v118
  %v120 = vpop.f32.mrb[0].mxu0
  %v121 = vadd.f32 0.0, %v120
  %122 = vdwg.mxu0
  %v124 = vcombine.high %v37, %v37
  %v126 = vsel %vm43, %v39, 0
  %v128 = vsel %vm47, %v37, 0
  %v130 = vsel %vm47, %v124, 0
  %132 = vmatprep.subr.mxu0 %v130
  %133 = vmatpush1.msra.mxu0 %v128
  %134 = vmatprep.subr.mxu0 0.0
  %135 = vmatpush1.msra.mxu0 0.0
  %136 = vmatprep.subr.mxu0 0.0
  %137 = vmatpush1.msra.mxu0 0.0
  %138 = vmatprep.subr.mxu0 0.0
  %139 = vmatpush1.msra.mxu0 0.0
  %140 = vmatprep.subr.mxu0 0.0
  %141 = vmatpush1.msra.mxu0 0.0
  %142 = vmatprep.subr.mxu0 0.0
  %143 = vmatpush1.msra.mxu0 0.0
  %144 = vmatprep.subr.mxu0 0.0
  %145 = vmatpush1.msra.mxu0 0.0
  %146 = vmatprep.subr.mxu0 0.0
  %147 = vmatpush1.msra.mxu0 0.0
  %148 = vmatprep.subr.mxu0 0.0
  %149 = vmatpush1.msra.mxu0 0.0
  %150 = vmatprep.subr.mxu0 0.0
  %151 = vmatpush1.msra.mxu0 0.0
  %152 = vmatprep.subr.mxu0 0.0
  %153 = vmatpush1.msra.mxu0 0.0
  %154 = vmatprep.subr.mxu0 0.0
  %155 = vmatpush1.msra.mxu0 0.0
  %156 = vmatprep.subr.mxu0 0.0
  %157 = vmatpush1.msra.mxu0 0.0
  %158 = vmatprep.subr.mxu0 0.0
  %159 = vmatpush1.msra.mxu0 0.0
  %160 = vmatprep.subr.mxu0 0.0
  %161 = vmatpush1.msra.mxu0 0.0
  %162 = vmatprep.subr.mxu0 0.0
  %163 = vmatpush1.msra.mxu0 0.0
  %164 = vmatprep.subr.mxu0 0.0
  %165 = vmatpush1.msra.mxu0 0.0
  %166 = vmatprep.subr.mxu0 0.0
  %167 = vmatpush1.msra.mxu0 0.0
  %168 = vmatprep.subr.mxu0 0.0
  %169 = vmatpush1.msra.mxu0 0.0
  %170 = vmatprep.subr.mxu0 0.0
  %171 = vmatpush1.msra.mxu0 0.0
  %172 = vmatprep.subr.mxu0 0.0
  %173 = vmatpush1.msra.mxu0 0.0
  %174 = vmatprep.subr.mxu0 0.0
  %175 = vmatpush1.msra.mxu0 0.0
  %176 = vmatprep.subr.mxu0 0.0
  %177 = vmatpush1.msra.mxu0 0.0
  %178 = vmatprep.subr.mxu0 0.0
  %179 = vmatpush1.msra.mxu0 0.0
  %180 = vmatprep.subr.mxu0 0.0
  %181 = vmatpush1.msra.mxu0 0.0
  %182 = vmatprep.subr.mxu0 0.0
  %183 = vmatpush1.msra.mxu0 0.0
  %184 = vmatprep.subr.mxu0 0.0
  %185 = vmatpush1.msra.mxu0 0.0
  %186 = vmatprep.subr.mxu0 0.0
  %187 = vmatpush1.msra.mxu0 0.0
  %188 = vmatprep.subr.mxu0 0.0
  %189 = vmatpush1.msra.mxu0 0.0
  %190 = vmatprep.subr.mxu0 0.0
  %191 = vmatpush1.msra.mxu0 0.0
  %192 = vmatprep.subr.mxu0 0.0
  %193 = vmatpush1.msra.mxu0 0.0
  %194 = vmatprep.subr.mxu0 0.0
  %195 = vmatpush1.msra.mxu0 0.0
  %196 = vmatprep.mubr.f32.mxu0 0.0
  %197 = vmatmul.mubr.f32.gmra.mrb[0].mxu0 %v126
  %v198 = vpop.f32.mrb[0].mxu0
  %v199 = vadd.f32 %v119, %v198
  %v200 = vpop.f32.mrb[0].mxu0
  %v201 = vadd.f32 %v121, %v200
  %202 = vdwg.mxu0
  %v203 = vld [vmem:[%s4] sm:$0xf]
  %v204 = vld [vmem:[%s5] sm:$0xf]
  %v206 = vsel %vm43, %v204, 0
  %208 = vmatprep.subr.mxu0 %v50
  %209 = vmatpush1.msra.mxu0 %v48
  %210 = vmatprep.subr.mxu0 0.0
  %211 = vmatpush1.msra.mxu0 0.0
  %212 = vmatprep.subr.mxu0 0.0
  %213 = vmatpush1.msra.mxu0 0.0
  %214 = vmatprep.subr.mxu0 0.0
  %215 = vmatpush1.msra.mxu0 0.0
  %216 = vmatprep.subr.mxu0 0.0
  %217 = vmatpush1.msra.mxu0 0.0
  %218 = vmatprep.subr.mxu0 0.0
  %219 = vmatpush1.msra.mxu0 0.0
  %220 = vmatprep.subr.mxu0 0.0
  %221 = vmatpush1.msra.mxu0 0.0
  %222 = vmatprep.subr.mxu0 0.0
  %223 = vmatpush1.msra.mxu0 0.0
  %224 = vmatprep.subr.mxu0 0.0
  %225 = vmatpush1.msra.mxu0 0.0
  %226 = vmatprep.subr.mxu0 0.0
  %227 = vmatpush1.msra.mxu0 0.0
  %228 = vmatprep.subr.mxu0 0.0
  %229 = vmatpush1.msra.mxu0 0.0
  %230 = vmatprep.subr.mxu0 0.0
  %231 = vmatpush1.msra.mxu0 0.0
  %232 = vmatprep.subr.mxu0 0.0
  %233 = vmatpush1.msra.mxu0 0.0
  %234 = vmatprep.subr.mxu0 0.0
  %235 = vmatpush1.msra.mxu0 0.0
  %236 = vmatprep.subr.mxu0 0.0
  %237 = vmatpush1.msra.mxu0 0.0
  %238 = vmatprep.subr.mxu0 0.0
  %239 = vmatpush1.msra.mxu0 0.0
  %240 = vmatprep.subr.mxu0 0.0
  %241 = vmatpush1.msra.mxu0 0.0
  %242 = vmatprep.subr.mxu0 0.0
  %243 = vmatpush1.msra.mxu0 0.0
  %244 = vmatprep.subr.mxu0 0.0
  %245 = vmatpush1.msra.mxu0 0.0
  %246 = vmatprep.subr.mxu0 0.0
  %247 = vmatpush1.msra.mxu0 0.0
  %248 = vmatprep.subr.mxu0 0.0
  %249 = vmatpush1.msra.mxu0 0.0
  %250 = vmatprep.subr.mxu0 0.0
  %251 = vmatpush1.msra.mxu0 0.0
  %252 = vmatprep.subr.mxu0 0.0
  %253 = vmatpush1.msra.mxu0 0.0
  %254 = vmatprep.subr.mxu0 0.0
  %255 = vmatpush1.msra.mxu0 0.0
  %256 = vmatprep.subr.mxu0 0.0
  %257 = vmatpush1.msra.mxu0 0.0
  %258 = vmatprep.subr.mxu0 0.0
  %259 = vmatpush1.msra.mxu0 0.0
  %260 = vmatprep.subr.mxu0 0.0
  %261 = vmatpush1.msra.mxu0 0.0
  %262 = vmatprep.subr.mxu0 0.0
  %263 = vmatpush1.msra.mxu0 0.0
  %264 = vmatprep.subr.mxu0 0.0
  %265 = vmatpush1.msra.mxu0 0.0
  %266 = vmatprep.subr.mxu0 0.0
  %267 = vmatpush1.msra.mxu0 0.0
  %268 = vmatprep.subr.mxu0 0.0
  %269 = vmatpush1.msra.mxu0 0.0
  %270 = vmatprep.subr.mxu0 0.0
  %271 = vmatpush1.msra.mxu0 0.0
  %272 = vmatprep.mubr.f32.mxu0 0.0
  %273 = vmatmul.mubr.f32.gmra.mrb[0].mxu0 %v206
  %v274 = vpop.f32.mrb[0].mxu0
  %v275 = vadd.f32 0.0, %v274
  %v276 = vpop.f32.mrb[0].mxu0
  %v277 = vadd.f32 0.0, %v276
  %278 = vdwg.mxu0
  %v280 = vsel %vm43, %v203, 0
  %282 = vmatprep.subr.mxu0 %v130
  %283 = vmatpush1.msra.mxu0 %v128
  %284 = vmatprep.subr.mxu0 0.0
  %285 = vmatpush1.msra.mxu0 0.0
  %286 = vmatprep.subr.mxu0 0.0
  %287 = vmatpush1.msra.mxu0 0.0
  %288 = vmatprep.subr.mxu0 0.0
  %289 = vmatpush1.msra.mxu0 0.0
  %290 = vmatprep.subr.mxu0 0.0
  %291 = vmatpush1.msra.mxu0 0.0
  %292 = vmatprep.subr.mxu0 0.0
  %293 = vmatpush1.msra.mxu0 0.0
  %294 = vmatprep.subr.mxu0 0.0
  %295 = vmatpush1.msra.mxu0 0.0
  %296 = vmatprep.subr.mxu0 0.0
  %297 = vmatpush1.msra.mxu0 0.0
  %298 = vmatprep.subr.mxu0 0.0
  %299 = vmatpush1.msra.mxu0 0.0
  %300 = vmatprep.subr.mxu0 0.0
  %301 = vmatpush1.msra.mxu0 0.0
  %302 = vmatprep.subr.mxu0 0.0
  %303 = vmatpush1.msra.mxu0 0.0
  %304 = vmatprep.subr.mxu0 0.0
  %305 = vmatpush1.msra.mxu0 0.0
  %306 = vmatprep.subr.mxu0 0.0
  %307 = vmatpush1.msra.mxu0 0.0
  %308 = vmatprep.subr.mxu0 0.0
  %309 = vmatpush1.msra.mxu0 0.0
  %310 = vmatprep.subr.mxu0 0.0
  %311 = vmatpush1.msra.mxu0 0.0
  %312 = vmatprep.subr.mxu0 0.0
  %313 = vmatpush1.msra.mxu0 0.0
  %314 = vmatprep.subr.mxu0 0.0
  %315 = vmatpush1.msra.mxu0 0.0
  %316 = vmatprep.subr.mxu0 0.0
  %317 = vmatpush1.msra.mxu0 0.0
  %318 = vmatprep.subr.mxu0 0.0
  %319 = vmatpush1.msra.mxu0 0.0
  %320 = vmatprep.subr.mxu0 0.0
  %321 = vmatpush1.msra.mxu0 0.0
  %322 = vmatprep.subr.mxu0 0.0
  %323 = vmatpush1.msra.mxu0 0.0
  %324 = vmatprep.subr.mxu0 0.0
  %325 = vmatpush1.msra.mxu0 0.0
  %326 = vmatprep.subr.mxu0 0.0
  %327 = vmatpush1.msra.mxu0 0.0
  %328 = vmatprep.subr.mxu0 0.0
  %329 = vmatpush1.msra.mxu0 0.0
  %330 = vmatprep.subr.mxu0 0.0
  %331 = vmatpush1.msra.mxu0 0.0
  %332 = vmatprep.subr.mxu0 0.0
  %333 = vmatpush1.msra.mxu0 0.0
  %334 = vmatprep.subr.mxu0 0.0
  %335 = vmatpush1.msra.mxu0 0.0
  %336 = vmatprep.subr.mxu0 0.0
  %337 = vmatpush1.msra.mxu0 0.0
  %338 = vmatprep.subr.mxu0 0.0
  %339 = vmatpush1.msra.mxu0 0.0
  %340 = vmatprep.subr.mxu0 0.0
  %341 = vmatpush1.msra.mxu0 0.0
  %342 = vmatprep.subr.mxu0 0.0
  %343 = vmatpush1.msra.mxu0 0.0
  %344 = vmatprep.subr.mxu0 0.0
  %345 = vmatpush1.msra.mxu0 0.0
  %346 = vmatprep.mubr.f32.mxu0 0.0
  %347 = vmatmul.mubr.f32.gmra.mrb[0].mxu0 %v280
  %v348 = vpop.f32.mrb[0].mxu0
  %v349 = vadd.f32 %v275, %v348
  %v350 = vpop.f32.mrb[0].mxu0
  %v351 = vadd.f32 %v277, %v350
  %352 = vdwg.mxu0
  %v353 = vsel %vm47, %v199, 0.0
  %v354 = vsel %vm47, %v201, 0.0
  %v355 = vadd.f32 %v353, %v354
  %356 = vadd.xlane.f32.xlu0 %v355
  %v357 = vpop.xlane.xlu0 %356
  %v358 = vadd.f32 %v357, 0.0
  %v359 = vsel %vm47, %v349, 0.0
  %v360 = vsel %vm47, %v351, 0.0
  %v361 = vadd.f32 %v359, %v360
  %362 = vadd.xlane.f32.xlu0 %v361
  %v363 = vpop.xlane.xlu0 %362
  %v364 = vadd.f32 %v363, 0.0
  %s365 = scalar_lea.vmem %s0, 8
  %v366 = vld [vmem:[%s365] sm:$0xff]
  %s367 = scalar_lea.vmem %s1, 8
  %v368 = vld [vmem:[%s367] sm:$0xff]
  %v370 = vcombine.high %v368, %v368
  %v371 = vsel %vm47, %v368, 0
  %v373 = vsel %vm47, %v370, 0
  %375 = vmatprep.subr.mxu0 %v373
  %376 = vmatpush1.msra.mxu0 %v371
  %377 = vmatprep.subr.mxu0 0.0
  %378 = vmatpush1.msra.mxu0 0.0
  %379 = vmatprep.subr.mxu0 0.0
  %380 = vmatpush1.msra.mxu0 0.0
  %381 = vmatprep.subr.mxu0 0.0
  %382 = vmatpush1.msra.mxu0 0.0
  %383 = vmatprep.subr.mxu0 0.0
  %384 = vmatpush1.msra.mxu0 0.0
  %385 = vmatprep.subr.mxu0 0.0
  %386 = vmatpush1.msra.mxu0 0.0
  %387 = vmatprep.subr.mxu0 0.0
  %388 = vmatpush1.msra.mxu0 0.0
  %389 = vmatprep.subr.mxu0 0.0
  %390 = vmatpush1.msra.mxu0 0.0
  %391 = vmatprep.subr.mxu0 0.0
  %392 = vmatpush1.msra.mxu0 0.0
  %393 = vmatprep.subr.mxu0 0.0
  %394 = vmatpush1.msra.mxu0 0.0
  %395 = vmatprep.subr.mxu0 0.0
  %396 = vmatpush1.msra.mxu0 0.0
  %397 = vmatprep.subr.mxu0 0.0
  %398 = vmatpush1.msra.mxu0 0.0
  %399 = vmatprep.subr.mxu0 0.0
  %400 = vmatpush1.msra.mxu0 0.0
  %401 = vmatprep.subr.mxu0 0.0
  %402 = vmatpush1.msra.mxu0 0.0
  %403 = vmatprep.subr.mxu0 0.0
  %404 = vmatpush1.msra.mxu0 0.0
  %405 = vmatprep.subr.mxu0 0.0
  %406 = vmatpush1.msra.mxu0 0.0
  %407 = vmatprep.subr.mxu0 0.0
  %408 = vmatpush1.msra.mxu0 0.0
  %409 = vmatprep.subr.mxu0 0.0
  %410 = vmatpush1.msra.mxu0 0.0
  %411 = vmatprep.subr.mxu0 0.0
  %412 = vmatpush1.msra.mxu0 0.0
  %413 = vmatprep.subr.mxu0 0.0
  %414 = vmatpush1.msra.mxu0 0.0
  %415 = vmatprep.subr.mxu0 0.0
  %416 = vmatpush1.msra.mxu0 0.0
  %417 = vmatprep.subr.mxu0 0.0
  %418 = vmatpush1.msra.mxu0 0.0
  %419 = vmatprep.subr.mxu0 0.0
  %420 = vmatpush1.msra.mxu0 0.0
  %421 = vmatprep.subr.mxu0 0.0
  %422 = vmatpush1.msra.mxu0 0.0
  %423 = vmatprep.subr.mxu0 0.0
  %424 = vmatpush1.msra.mxu0 0.0
  %425 = vmatprep.subr.mxu0 0.0
  %426 = vmatpush1.msra.mxu0 0.0
  %427 = vmatprep.subr.mxu0 0.0
  %428 = vmatpush1.msra.mxu0 0.0
  %429 = vmatprep.subr.mxu0 0.0
  %430 = vmatpush1.msra.mxu0 0.0
  %431 = vmatprep.subr.mxu0 0.0
  %432 = vmatpush1.msra.mxu0 0.0
  %433 = vmatprep.subr.mxu0 0.0
  %434 = vmatpush1.msra.mxu0 0.0
  %435 = vmatprep.subr.mxu0 0.0
  %436 = vmatpush1.msra.mxu0 0.0
  %437 = vmatprep.subr.mxu0 0.0
  %438 = vmatpush1.msra.mxu0 0.0
  %439 = vmatprep.mubr.f32.mxu0 0.0
  %440 = vmatmul.mubr.f32.gmra.mrb[0].mxu0 %v45
  %v441 = vpop.f32.mrb[0].mxu0
  %v442 = vadd.f32 0.0, %v441
  %v443 = vpop.f32.mrb[0].mxu0
  %v444 = vadd.f32 0.0, %v443
  %445 = vdwg.mxu0
  %v447 = vcombine.high %v366, %v366
  %v448 = vsel %vm47, %v366, 0
  %v450 = vsel %vm47, %v447, 0
  %452 = vmatprep.subr.mxu0 %v450
  %453 = vmatpush1.msra.mxu0 %v448
  %454 = vmatprep.subr.mxu0 0.0
  %455 = vmatpush1.msra.mxu0 0.0
  %456 = vmatprep.subr.mxu0 0.0
  %457 = vmatpush1.msra.mxu0 0.0
  %458 = vmatprep.subr.mxu0 0.0
  %459 = vmatpush1.msra.mxu0 0.0
  %460 = vmatprep.subr.mxu0 0.0
  %461 = vmatpush1.msra.mxu0 0.0
  %462 = vmatprep.subr.mxu0 0.0
  %463 = vmatpush1.msra.mxu0 0.0
  %464 = vmatprep.subr.mxu0 0.0
  %465 = vmatpush1.msra.mxu0 0.0
  %466 = vmatprep.subr.mxu0 0.0
  %467 = vmatpush1.msra.mxu0 0.0
  %468 = vmatprep.subr.mxu0 0.0
  %469 = vmatpush1.msra.mxu0 0.0
  %470 = vmatprep.subr.mxu0 0.0
  %471 = vmatpush1.msra.mxu0 0.0
  %472 = vmatprep.subr.mxu0 0.0
  %473 = vmatpush1.msra.mxu0 0.0
  %474 = vmatprep.subr.mxu0 0.0
  %475 = vmatpush1.msra.mxu0 0.0
  %476 = vmatprep.subr.mxu0 0.0
  %477 = vmatpush1.msra.mxu0 0.0
  %478 = vmatprep.subr.mxu0 0.0
  %479 = vmatpush1.msra.mxu0 0.0
  %480 = vmatprep.subr.mxu0 0.0
  %481 = vmatpush1.msra.mxu0 0.0
  %482 = vmatprep.subr.mxu0 0.0
  %483 = vmatpush1.msra.mxu0 0.0
  %484 = vmatprep.subr.mxu0 0.0
  %485 = vmatpush1.msra.mxu0 0.0
  %486 = vmatprep.subr.mxu0 0.0
  %487 = vmatpush1.msra.mxu0 0.0
  %488 = vmatprep.subr.mxu0 0.0
  %489 = vmatpush1.msra.mxu0 0.0
  %490 = vmatprep.subr.mxu0 0.0
  %491 = vmatpush1.msra.mxu0 0.0
  %492 = vmatprep.subr.mxu0 0.0
  %493 = vmatpush1.msra.mxu0 0.0
  %494 = vmatprep.subr.mxu0 0.0
  %495 = vmatpush1.msra.mxu0 0.0
  %496 = vmatprep.subr.mxu0 0.0
  %497 = vmatpush1.msra.mxu0 0.0
  %498 = vmatprep.subr.mxu0 0.0
  %499 = vmatpush1.msra.mxu0 0.0
  %500 = vmatprep.subr.mxu0 0.0
  %501 = vmatpush1.msra.mxu0 0.0
  %502 = vmatprep.subr.mxu0 0.0
  %503 = vmatpush1.msra.mxu0 0.0
  %504 = vmatprep.subr.mxu0 0.0
  %505 = vmatpush1.msra.mxu0 0.0
  %506 = vmatprep.subr.mxu0 0.0
  %507 = vmatpush1.msra.mxu0 0.0
  %508 = vmatprep.subr.mxu0 0.0
  %509 = vmatpush1.msra.mxu0 0.0
  %510 = vmatprep.subr.mxu0 0.0
  %511 = vmatpush1.msra.mxu0 0.0
  %512 = vmatprep.subr.mxu0 0.0
  %513 = vmatpush1.msra.mxu0 0.0
  %514 = vmatprep.subr.mxu0 0.0
  %515 = vmatpush1.msra.mxu0 0.0
  %516 = vmatprep.mubr.f32.mxu0 0.0
  %517 = vmatmul.mubr.f32.gmra.mrb[0].mxu0 %v126
  %v518 = vpop.f32.mrb[0].mxu0
  %v519 = vadd.f32 %v442, %v518
  %v520 = vpop.f32.mrb[0].mxu0
  %v521 = vadd.f32 %v444, %v520
  %522 = vdwg.mxu0
  %523 = vmatprep.subr.mxu0 %v373
  %524 = vmatpush1.msra.mxu0 %v371
  %525 = vmatprep.subr.mxu0 0.0
  %526 = vmatpush1.msra.mxu0 0.0
  %527 = vmatprep.subr.mxu0 0.0
  %528 = vmatpush1.msra.mxu0 0.0
  %529 = vmatprep.subr.mxu0 0.0
  %530 = vmatpush1.msra.mxu0 0.0
  %531 = vmatprep.subr.mxu0 0.0
  %532 = vmatpush1.msra.mxu0 0.0
  %533 = vmatprep.subr.mxu0 0.0
  %534 = vmatpush1.msra.mxu0 0.0
  %535 = vmatprep.subr.mxu0 0.0
  %536 = vmatpush1.msra.mxu0 0.0
  %537 = vmatprep.subr.mxu0 0.0
  %538 = vmatpush1.msra.mxu0 0.0
  %539 = vmatprep.subr.mxu0 0.0
  %540 = vmatpush1.msra.mxu0 0.0
  %541 = vmatprep.subr.mxu0 0.0
  %542 = vmatpush1.msra.mxu0 0.0
  %543 = vmatprep.subr.mxu0 0.0
  %544 = vmatpush1.msra.mxu0 0.0
  %545 = vmatprep.subr.mxu0 0.0
  %546 = vmatpush1.msra.mxu0 0.0
  %547 = vmatprep.subr.mxu0 0.0
  %548 = vmatpush1.msra.mxu0 0.0
  %549 = vmatprep.subr.mxu0 0.0
  %550 = vmatpush1.msra.mxu0 0.0
  %551 = vmatprep.subr.mxu0 0.0
  %552 = vmatpush1.msra.mxu0 0.0
  %553 = vmatprep.subr.mxu0 0.0
  %554 = vmatpush1.msra.mxu0 0.0
  %555 = vmatprep.subr.mxu0 0.0
  %556 = vmatpush1.msra.mxu0 0.0
  %557 = vmatprep.subr.mxu0 0.0
  %558 = vmatpush1.msra.mxu0 0.0
  %559 = vmatprep.subr.mxu0 0.0
  %560 = vmatpush1.msra.mxu0 0.0
  %561 = vmatprep.subr.mxu0 0.0
  %562 = vmatpush1.msra.mxu0 0.0
  %563 = vmatprep.subr.mxu0 0.0
  %564 = vmatpush1.msra.mxu0 0.0
  %565 = vmatprep.subr.mxu0 0.0
  %566 = vmatpush1.msra.mxu0 0.0
  %567 = vmatprep.subr.mxu0 0.0
  %568 = vmatpush1.msra.mxu0 0.0
  %569 = vmatprep.subr.mxu0 0.0
  %570 = vmatpush1.msra.mxu0 0.0
  %571 = vmatprep.subr.mxu0 0.0
  %572 = vmatpush1.msra.mxu0 0.0
  %573 = vmatprep.subr.mxu0 0.0
  %574 = vmatpush1.msra.mxu0 0.0
  %575 = vmatprep.subr.mxu0 0.0
  %576 = vmatpush1.msra.mxu0 0.0
  %577 = vmatprep.subr.mxu0 0.0
  %578 = vmatpush1.msra.mxu0 0.0
  %579 = vmatprep.subr.mxu0 0.0
  %580 = vmatpush1.msra.mxu0 0.0
  %581 = vmatprep.subr.mxu0 0.0
  %582 = vmatpush1.msra.mxu0 0.0
  %583 = vmatprep.subr.mxu0 0.0
  %584 = vmatpush1.msra.mxu0 0.0
  %585 = vmatprep.subr.mxu0 0.0
  %586 = vmatpush1.msra.mxu0 0.0
  %587 = vmatprep.mubr.f32.mxu0 0.0
  %588 = vmatmul.mubr.f32.gmra.mrb[0].mxu0 %v206
  %v589 = vpop.f32.mrb[0].mxu0
  %v590 = vadd.f32 0.0, %v589
  %v591 = vpop.f32.mrb[0].mxu0
  %v592 = vadd.f32 0.0, %v591
  %593 = vdwg.mxu0
  %594 = vmatprep.subr.mxu0 %v450
  %595 = vmatpush1.msra.mxu0 %v448
  %596 = vmatprep.subr.mxu0 0.0
  %597 = vmatpush1.msra.mxu0 0.0
  %598 = vmatprep.subr.mxu0 0.0
  %599 = vmatpush1.msra.mxu0 0.0
  %600 = vmatprep.subr.mxu0 0.0
  %601 = vmatpush1.msra.mxu0 0.0
  %602 = vmatprep.subr.mxu0 0.0
  %603 = vmatpush1.msra.mxu0 0.0
  %604 = vmatprep.subr.mxu0 0.0
  %605 = vmatpush1.msra.mxu0 0.0
  %606 = vmatprep.subr.mxu0 0.0
  %607 = vmatpush1.msra.mxu0 0.0
  %608 = vmatprep.subr.mxu0 0.0
  %609 = vmatpush1.msra.mxu0 0.0
  %610 = vmatprep.subr.mxu0 0.0
  %611 = vmatpush1.msra.mxu0 0.0
  %612 = vmatprep.subr.mxu0 0.0
  %613 = vmatpush1.msra.mxu0 0.0
  %614 = vmatprep.subr.mxu0 0.0
  %615 = vmatpush1.msra.mxu0 0.0
  %616 = vmatprep.subr.mxu0 0.0
  %617 = vmatpush1.msra.mxu0 0.0
  %618 = vmatprep.subr.mxu0 0.0
  %619 = vmatpush1.msra.mxu0 0.0
  %620 = vmatprep.subr.mxu0 0.0
  %621 = vmatpush1.msra.mxu0 0.0
  %622 = vmatprep.subr.mxu0 0.0
  %623 = vmatpush1.msra.mxu0 0.0
  %624 = vmatprep.subr.mxu0 0.0
  %625 = vmatpush1.msra.mxu0 0.0
  %626 = vmatprep.subr.mxu0 0.0
  %627 = vmatpush1.msra.mxu0 0.0
  %628 = vmatprep.subr.mxu0 0.0
  %629 = vmatpush1.msra.mxu0 0.0
  %630 = vmatprep.subr.mxu0 0.0
  %631 = vmatpush1.msra.mxu0 0.0
  %632 = vmatprep.subr.mxu0 0.0
  %633 = vmatpush1.msra.mxu0 0.0
  %634 = vmatprep.subr.mxu0 0.0
  %635 = vmatpush1.msra.mxu0 0.0
  %636 = vmatprep.subr.mxu0 0.0
  %637 = vmatpush1.msra.mxu0 0.0
  %638 = vmatprep.subr.mxu0 0.0
  %639 = vmatpush1.msra.mxu0 0.0
  %640 = vmatprep.subr.mxu0 0.0
  %641 = vmatpush1.msra.mxu0 0.0
  %642 = vmatprep.subr.mxu0 0.0
  %643 = vmatpush1.msra.mxu0 0.0
  %644 = vmatprep.subr.mxu0 0.0
  %645 = vmatpush1.msra.mxu0 0.0
  %646 = vmatprep.subr.mxu0 0.0
  %647 = vmatpush1.msra.mxu0 0.0
  %648 = vmatprep.subr.mxu0 0.0
  %649 = vmatpush1.msra.mxu0 0.0
  %650 = vmatprep.subr.mxu0 0.0
  %651 = vmatpush1.msra.mxu0 0.0
  %652 = vmatprep.subr.mxu0 0.0
  %653 = vmatpush1.msra.mxu0 0.0
  %654 = vmatprep.subr.mxu0 0.0
  %655 = vmatpush1.msra.mxu0 0.0
  %656 = vmatprep.subr.mxu0 0.0
  %657 = vmatpush1.msra.mxu0 0.0
  %658 = vmatprep.mubr.f32.mxu0 0.0
  %659 = vmatmul.mubr.f32.gmra.mrb[0].mxu0 %v280
  %v660 = vpop.f32.mrb[0].mxu0
  %v661 = vadd.f32 %v590, %v660
  %v662 = vpop.f32.mrb[0].mxu0
  %v663 = vadd.f32 %v592, %v662
  %664 = vdwg.mxu0
  %v665 = vsel %vm47, %v519, 0.0
  %v666 = vsel %vm47, %v521, 0.0
  %v667 = vadd.f32 %v665, %v666
  %668 = vadd.xlane.f32.xlu0 %v667
  %v669 = vpop.xlane.xlu0 %668
  %v670 = vadd.f32 %v358, %v669
  %v671 = vsel %vm47, %v661, 0.0
  %v672 = vsel %vm47, %v663, 0.0
  %v673 = vadd.f32 %v671, %v672
  %674 = vadd.xlane.f32.xlu0 %v673
  %v675 = vpop.xlane.xlu0 %674
  %v676 = vadd.f32 %v364, %v675
  %v677 = vmul.f32 %v670, 0.001953125
  %v678 = vmul.f32 %v676, 0.001953125
  %v679 = vsub.f32 %v199, %v677
  %v680 = vsub.f32 %v201, %v677
  %v681 = vsub.f32 %v349, %v678
  %v682 = vsub.f32 %v351, %v678
  %v683 = vmul.f32 %v679, %v679
  %v684 = vmul.f32 %v680, %v680
  %v685 = vsel %vm47, %v683, 0.0
  %v686 = vsel %vm47, %v684, 0.0
  %v687 = vadd.f32 %v685, %v686
  %688 = vadd.xlane.f32.xlu0 %v687
  %v689 = vpop.xlane.xlu0 %688
  %v690 = vadd.f32 %v689, 0.0
  %v691 = vmul.f32 %v681, %v681
  %v692 = vmul.f32 %v682, %v682
  %v693 = vsel %vm47, %v691, 0.0
  %v694 = vsel %vm47, %v692, 0.0
  %v695 = vadd.f32 %v693, %v694
  %696 = vadd.xlane.f32.xlu0 %v695
  %v697 = vpop.xlane.xlu0 %696
  %v698 = vadd.f32 %v697, 0.0
  %v699 = vsub.f32 %v519, %v677
  %v700 = vsub.f32 %v521, %v677
  %v701 = vsub.f32 %v661, %v678
  %v702 = vsub.f32 %v663, %v678
  %v703 = vmul.f32 %v699, %v699
  %v704 = vmul.f32 %v700, %v700
  %v705 = vsel %vm47, %v703, 0.0
  %v706 = vsel %vm47, %v704, 0.0
  %v707 = vadd.f32 %v705, %v706
  %708 = vadd.xlane.f32.xlu0 %v707
  %v709 = vpop.xlane.xlu0 %708
  %v710 = vadd.f32 %v690, %v709
  %v711 = vmul.f32 %v701, %v701
  %v712 = vmul.f32 %v702, %v702
  %v713 = vsel %vm47, %v711, 0.0
  %v714 = vsel %vm47, %v712, 0.0
  %v715 = vadd.f32 %v713, %v714
  %716 = vadd.xlane.f32.xlu0 %v715
  %v717 = vpop.xlane.xlu0 %716
  %v718 = vadd.f32 %v698, %v717
  %v719 = vld [vmem:[%s6] sm:$0xf]
  %v720 = vmul.f32 %v710, 0.001953125
  %v721 = vadd.f32 %v720, 1e-05
  %v722 = vrsqrt.pop %v721
  %v723 = vmul.f32 %v719, %v722
  %v724 = vld [vmem:[%s8] sm:$0xf]
  %v725 = vmul.f32 %v718, 0.001953125
  %v726 = vadd.f32 %v725, 1e-05
  %v727 = vrsqrt.pop %v726
  %v728 = vmul.f32 %v724, %v727
  %v729 = vld [vmem:[%s7] sm:$0xf]
  %v730 = vmul.f32 %v677, %v723
  %v731 = vsub.f32 %v729, %v730
  %v732 = vld [vmem:[%s9] sm:$0xf]
  %v733 = vmul.f32 %v678, %v728
  %v734 = vsub.f32 %v732, %v733
  %736 = vset.pattern.permute.xlu0 0
  %737 = vperm.xlu0 %736, %v723
  %v738 = vpop.permute.xlu0 %737
  %v740 = vmul.f32 %v199, %v738
  %v741 = vmul.f32 %v201, %v738
  %743 = vset.pattern.permute.xlu0 0
  %744 = vperm.xlu0 %743, %v731
  %v745 = vpop.permute.xlu0 %744
  %v747 = vadd.f32 %v740, %v745
  %v748 = vadd.f32 %v741, %v745
  %v749 = vmax.f32 %v747, 0.0
  %v750 = vmax.f32 %v748, 0.0
  %v753 = vcombine.low %v749, %v750
  %755 = vst [vmem:[%s10] sm:$0xff] %v753
  %757 = vset.pattern.permute.xlu0 0
  %758 = vperm.xlu0 %757, %v728
  %v759 = vpop.permute.xlu0 %758
  %v761 = vmul.f32 %v349, %v759
  %v762 = vmul.f32 %v351, %v759
  %764 = vset.pattern.permute.xlu0 0
  %765 = vperm.xlu0 %764, %v734
  %v766 = vpop.permute.xlu0 %765
  %v768 = vadd.f32 %v761, %v766
  %v769 = vadd.f32 %v762, %v766
  %v770 = vmax.f32 %v768, 0.0
  %v771 = vmax.f32 %v769, 0.0
  %v774 = vcombine.low %v770, %v771
  %776 = vst [vmem:[%s11] sm:$0xff] %v774
  %v777 = vmul.f32 %v519, %v738
  %v778 = vmul.f32 %v521, %v738
  %v779 = vadd.f32 %v777, %v745
  %v780 = vadd.f32 %v778, %v745
  %v781 = vmax.f32 %v779, 0.0
  %v782 = vmax.f32 %v780, 0.0
  %v785 = vcombine.low %v781, %v782
  %s787 = scalar_lea.vmem %s10, 8
  %788 = vst [vmem:[%s787] sm:$0xff] %v785
  %v789 = vmul.f32 %v661, %v759
  %v790 = vmul.f32 %v663, %v759
  %v791 = vadd.f32 %v789, %v766
  %v792 = vadd.f32 %v790, %v766
  %v793 = vmax.f32 %v791, 0.0
  %v794 = vmax.f32 %v792, 0.0
  %v797 = vcombine.low %v793, %v794
  %s799 = scalar_lea.vmem %s11, 8
  %800 = vst [vmem:[%s799] sm:$0xff] %v797
  // Predicated region
  $region42: #{nddr_forward.1} parent=0 // pred_check
    _
  $region43: #{nddr_forward.1} parent=0 // pred_check_branch
    %802 = sbr.rel (0) target = $region45
  $region44: #{nddr_forward.1} parent=0 // pred_region
    _
  $region45: #{nddr_forward.1} parent=0 // pred_fallthru
    _
  // Predicated region
  $region46: #{nddr_forward.1} parent=0 // pred_check
    _
  $region47: #{nddr_forward.1} parent=0 // pred_check_branch
    %804 = sbr.rel (0) target = $region49
  $region48: #{nddr_forward.1} parent=0 // pred_region
    _
  $region49: #{nddr_forward.1} parent=0 // pred_fallthru
    _
  // Predicated region
  $region50: #{nddr_forward.1} parent=0 // pred_check
    _
  $region51: #{nddr_forward.1} parent=0 // pred_check_branch
    %806 = sbr.rel (0) target = $region53
  $region52: #{nddr_forward.1} parent=0 // pred_region
    _
  $region53: #{nddr_forward.1} parent=0 // pred_fallthru
    _
  // Predicated region
  $region54: #{nddr_forward.1} parent=0 // pred_check
    _
  $region55: #{nddr_forward.1} parent=0 // pred_check_branch
    %808 = sbr.rel (0) target = $region57
  $region56: #{nddr_forward.1} parent=0 // pred_region
    _
  $region57: #{nddr_forward.1} parent=0 // pred_fallthru
    _

</llo_original>
